<compile_context>
chip_gen: v7x
topology: tpu7x:2x2x1
jax: 0.10.0
libtpu: 0.0.40
codegen_flags: <defaults>
</compile_context>

<pallas_src>
import functools
import math

import jax
import jax.numpy as jnp
import numpy as np
from jax.experimental import pallas as pl
from jax.experimental.pallas import tpu as pltpu


def _round_up(n, m):
    return ((n + m - 1) // m) * m


def _device_kind():
    try:
        return jax.devices()[0].device_kind.lower()
    except Exception:
        return ""


def choose_kernel_config(batch):
    """Generation-aware (tile_rows, bf16_tanh)."""
    kind = _device_kind()
    two_tensorcores = "v7" in kind          # v7x: 2 TensorCores/chip share the parallel grid axis
    bf16_tanh = "v5" not in kind            # v5e VPU/EUP have no bf16 datapath -> keep f32 tanh
    b8 = _round_up(max(batch, 8), 8)
    if two_tensorcores and b8 >= 16:
        tile = _round_up((b8 + 1) // 2, 8)  # >= 2 parallel grid steps so both TCs work
    else:
        tile = b8                           # single grid step on 1-TC chips (no per-step overhead)
    tile = min(tile, 512)                   # VMEM safety cap (weights are constant-index/resident)
    return tile, bf16_tanh


def _make_discriminator_kernel(n_hidden, bf16_tanh):
    """Fused forward: x -> [Linear(W*scale) + shift -> tanh]*n_hidden -> Linear + bias."""

    def kernel(*refs):
        x_ref = refs[0]
        o_ref = refs[-1]
        h = x_ref[...].astype(jnp.bfloat16)                    # f32 -> bf16 pack (cheap VPU op)
        idx = 1
        for _ in range(n_hidden):
            w_ref, s_ref = refs[idx], refs[idx + 1]
            idx += 2
            z = jnp.dot(h, w_ref[...], preferred_element_type=jnp.float32)  # MXU, f32 acc
            z = z + s_ref[...]                                 # folded bias + BatchNorm shift
            if bf16_tanh:
                h = jnp.tanh(z.astype(jnp.bfloat16))           # packed bf16 EUP (v6e/v7x)
            else:
                h = jnp.tanh(z).astype(jnp.bfloat16)           # f32 EUP path (v5e)
        w_ref, b_ref = refs[idx], refs[idx + 1]
        y = jnp.dot(h, w_ref[...], preferred_element_type=jnp.float32) + b_ref[...]
        o_ref[...] = y.astype(o_ref.dtype)

    return kernel


def prepare_discriminator_params(linear_params, bn_params=None, bn_eps=1e-5):
    """One-time param prep: fold BN + bias, pad feature dims to 128, cast weights to bf16.

    Returns (prep_args, n_hidden, d_out) where prep_args is a flat tuple of arrays in
    kernel-argument order: (W0', shift0', ..., W_last, b_last).
    """
    n_hidden = len(linear_params) - 1
    dims = [linear_params[0][0].shape[0]] + [w.shape[1] for (w, _) in linear_params]
    pdims = [_round_up(d, 128) for d in dims]

    args = []
    for i in range(n_hidden):
        w, b = linear_params[i]
        din, dout = w.shape
        if bn_params is not None:
            gamma, beta, mean, var = bn_params[i]
            scale = gamma / jnp.sqrt(var + bn_eps)
            shift = b * scale + (beta - mean * scale)
        else:
            scale = jnp.ones((dout,), jnp.float32)
            shift = b.astype(jnp.float32)
        w_folded = (w * scale[None, :]).astype(jnp.bfloat16)
        wp = jnp.pad(w_folded, ((0, pdims[i] - din), (0, pdims[i + 1] - dout)))
        sp = jnp.pad(shift.reshape(1, -1).astype(jnp.float32),
                     ((0, 0), (0, pdims[i + 1] - dout)))
        args += [wp, sp]

    w, b = linear_params[-1]
    din, dout = w.shape
    wp = jnp.pad(w.astype(jnp.bfloat16), ((0, pdims[-2] - din), (0, pdims[-1] - dout)))
    bp = jnp.pad(b.reshape(1, -1).astype(jnp.float32), ((0, 0), (0, pdims[-1] - dout)))
    args += [wp, bp]

    args = tuple(jax.device_put(a) for a in args)
    return args, n_hidden, dims[-1]


@functools.partial(jax.jit,
                   static_argnames=("n_hidden", "d_out", "tile_rows", "bf16_tanh"))
def discriminator_forward(x, prep_args, *, n_hidden, d_out, tile_rows, bf16_tanh):
    """Forward pass. x: (B, D_in) f32; prep_args from prepare_discriminator_params."""
    B, D_in = x.shape
    Dp_in = prep_args[0].shape[0]
    Dp_out = prep_args[-1].shape[1]

    Bp = _round_up(B, tile_rows)
    if Bp != B or Dp_in != D_in:
        x = jnp.pad(x, ((0, Bp - B), (0, Dp_in - D_in)))

    const = lambda i: (0, 0)
    in_specs = [pl.BlockSpec((tile_rows, Dp_in), lambda i: (i, 0))]
    for a in prep_args:
        in_specs.append(pl.BlockSpec(a.shape, const))        # resident (constant block index)
    out_spec = pl.BlockSpec((tile_rows, Dp_out), lambda i: (i, 0))
    grid = (Bp // tile_rows,)

    out_p = pl.pallas_call(
        _make_discriminator_kernel(n_hidden, bf16_tanh),
        out_shape=jax.ShapeDtypeStruct((Bp, Dp_out), jnp.float32),
        grid_spec=pl.GridSpec(grid=grid, in_specs=in_specs, out_specs=out_spec),
        compiler_params=pltpu.CompilerParams(dimension_semantics=("parallel",)),
    )(x, *prep_args)

    # Slice off batch padding and the lane padding of the 1-wide output.
    return out_p[:B, :d_out]


def init_discriminator_params(key, nb_units=(256, 256), batchnorm=True):
    """PyTorch-default Linear init (U[-1/sqrt(fan_in), 1/sqrt(fan_in)]); non-trivial BN stats."""
    linear_params = []
    bn_params = [] if batchnorm else None
    for i in range(len(nb_units)):
        fan_in = nb_units[i]
        fan_out = 1 if i == len(nb_units) - 1 else nb_units[i + 1]
        key, kw, kb = jax.random.split(key, 3)
        bound = 1.0 / math.sqrt(fan_in)
        w = jax.random.uniform(kw, (fan_in, fan_out), jnp.float32, -bound, bound)
        b = jax.random.uniform(kb, (fan_out,), jnp.float32, -bound, bound)
        linear_params.append((w, b))
        if batchnorm and i != len(nb_units) - 1:
            key, kg, kbt, km, kv = jax.random.split(key, 5)
            gamma = jax.random.uniform(kg, (fan_out,), jnp.float32, 0.5, 1.5)
            beta = 0.1 * jax.random.normal(kbt, (fan_out,), jnp.float32)
            mean = 0.1 * jax.random.normal(km, (fan_out,), jnp.float32)
            var = jax.random.uniform(kv, (fan_out,), jnp.float32, 0.5, 1.5)
            bn_params.append((gamma, beta, mean, var))
    return tuple(linear_params), (tuple(bn_params) if batchnorm else None)


def discriminator_reference(x, linear_params, bn_params=None, bn_eps=1e-5):
    """Pure-JAX f32 reference of the PyTorch forward (eval-mode BatchNorm)."""
    h = x
    n_hidden = len(linear_params) - 1
    for i in range(n_hidden):
        w, b = linear_params[i]
        z = jnp.dot(h, w) + b
        if bn_params is not None:
            gamma, beta, mean, var = bn_params[i]
            z = (z - mean) / jnp.sqrt(var + bn_eps) * gamma + beta
        h = jnp.tanh(z)
    w, b = linear_params[-1]
    return jnp.dot(h, w) + b


if __name__ == "__main__":
    key = jax.random.PRNGKey(0)

    nb_units = [256, 256]   # module defaults
    batch = 64              # small batch

    key, kx = jax.random.split(key)
    x = jax.random.normal(kx, (batch, nb_units[0]), jnp.float32)
    linear_params, bn_params = init_discriminator_params(key, nb_units, batchnorm=True)

    # One-time parameter prep (BN/bias fold + pad + bf16 cast), hoisted out of the forward.
    prep_args, n_hidden, d_out = prepare_discriminator_params(linear_params, bn_params)
    tile_rows, bf16_tanh = choose_kernel_config(batch)

    out = discriminator_forward(x, prep_args, n_hidden=n_hidden, d_out=d_out,
                                tile_rows=tile_rows, bf16_tanh=bf16_tanh)
    out = jax.block_until_ready(out)
    assert out.shape == (batch, 1), out.shape

    # Check vs. the full-f32 PyTorch-equivalent forward (bf16 MXU operands -> loose tolerance).
    ref_f32 = discriminator_reference(x, linear_params, bn_params)
    np.testing.assert_allclose(np.asarray(out), np.asarray(ref_f32), rtol=5e-2, atol=3e-2)

    print("KERNEL_OK")
</pallas_src>

<mosaic_0001>
module attributes {stable_mosaic.version = 11 : i64} {
  func.func @kernel(%arg0: i32, %arg1: memref<64x256xf32, #tpu.memory_space<vmem>>, %arg2: memref<256x256xbf16, #tpu.memory_space<vmem>>, %arg3: memref<1x256xf32, #tpu.memory_space<vmem>>, %arg4: memref<256x128xbf16, #tpu.memory_space<vmem>>, %arg5: memref<1x128xf32, #tpu.memory_space<vmem>>, %arg6: memref<64x128xf32, #tpu.memory_space<vmem>>) attributes {dimension_semantics = [#tpu.dimension_semantics<parallel>], iteration_bounds = array<i64: 1>, scalar_prefetch = 0 : i64, scratch_operands = 0 : i64, tpu.core_type = #tpu.core_type<tc>, window_params = [{transform_indices = @transform_0, window_bounds = array<i64: 64, 256>}, {pipeline_mode = #tpu.pipeline_mode<synchronous>, transform_indices = @transform_1, window_bounds = array<i64: 256, 256>}, {pipeline_mode = #tpu.pipeline_mode<synchronous>, transform_indices = @transform_2, window_bounds = array<i64: 1, 256>}, {pipeline_mode = #tpu.pipeline_mode<synchronous>, transform_indices = @transform_3, window_bounds = array<i64: 256, 128>}, {pipeline_mode = #tpu.pipeline_mode<synchronous>, transform_indices = @transform_4, window_bounds = array<i64: 1, 128>}, {transform_indices = @transform_5, window_bounds = array<i64: 64, 128>}]} {
    %c0 = arith.constant 0 : index
    %c0_0 = arith.constant 0 : index
    %0 = vector.load %arg1[%c0, %c0_0] : memref<64x256xf32, #tpu.memory_space<vmem>>, vector<64x256xf32>
    %1 = arith.truncf %0 : vector<64x256xf32> to vector<64x256xbf16>
    %c0_1 = arith.constant 0 : index
    %c0_2 = arith.constant 0 : index
    %2 = vector.load %arg2[%c0_1, %c0_2] : memref<256x256xbf16, #tpu.memory_space<vmem>>, vector<256x256xbf16>
    %cst = arith.constant dense<0.000000e+00> : vector<64x256xf32>
    %3 = tpu.matmul %1, %2, %cst {dimension_numbers = #tpu.dot_dimension_numbers<[1], [0], [0], [1], [0, 0, 1, 1], [], []>} : vector<64x256xbf16>, vector<256x256xbf16>, vector<64x256xf32> -> vector<64x256xf32>
    %c0_3 = arith.constant 0 : index
    %c0_4 = arith.constant 0 : index
    %4 = vector.load %arg3[%c0_3, %c0_4] : memref<1x256xf32, #tpu.memory_space<vmem>>, vector<1x256xf32>
    %5 = vector.broadcast %4 : vector<1x256xf32> to vector<64x256xf32>
    %6 = arith.addf %3, %5 : vector<64x256xf32>
    %7 = arith.truncf %6 : vector<64x256xf32> to vector<64x256xbf16>
    %8 = math.tanh %7 : vector<64x256xbf16>
    %c0_5 = arith.constant 0 : index
    %c0_6 = arith.constant 0 : index
    %9 = vector.load %arg4[%c0_5, %c0_6] : memref<256x128xbf16, #tpu.memory_space<vmem>>, vector<256x128xbf16>
    %cst_7 = arith.constant dense<0.000000e+00> : vector<64x128xf32>
    %10 = tpu.matmul %8, %9, %cst_7 {dimension_numbers = #tpu.dot_dimension_numbers<[1], [0], [0], [1], [0, 0, 1, 1], [], []>} : vector<64x256xbf16>, vector<256x128xbf16>, vector<64x128xf32> -> vector<64x128xf32>
    %c0_8 = arith.constant 0 : index
    %c0_9 = arith.constant 0 : index
    %11 = vector.load %arg5[%c0_8, %c0_9] : memref<1x128xf32, #tpu.memory_space<vmem>>, vector<1x128xf32>
    %12 = vector.broadcast %11 : vector<1x128xf32> to vector<64x128xf32>
    %13 = arith.addf %10, %12 : vector<64x128xf32>
    %c0_10 = arith.constant 0 : index
    %c0_11 = arith.constant 0 : index
    %14 = vector.load %arg6[%c0_10, %c0_11] : memref<64x128xf32, #tpu.memory_space<vmem>>, vector<64x128xf32>
    tpu.vector_store %arg6[%c0_10, %c0_11], %13 {strides = array<i32>} : memref<64x128xf32, #tpu.memory_space<vmem>>, vector<64x128xf32>,
    return
  }
  func.func @transform_0(%arg0: i32) -> (i32, i32) {
    %c0_i32 = arith.constant 0 : i32
    %c0_i32_0 = arith.constant 0 : i32
    return %arg0, %c0_i32 : i32, i32
  }
  func.func @transform_1(%arg0: i32) -> (i32, i32) {
    %c0_i32 = arith.constant 0 : i32
    %c0_i32_0 = arith.constant 0 : i32
    %c0_i32_1 = arith.constant 0 : i32
    return %c0_i32, %c0_i32_0 : i32, i32
  }
  func.func @transform_2(%arg0: i32) -> (i32, i32) {
    %c0_i32 = arith.constant 0 : i32
    %c0_i32_0 = arith.constant 0 : i32
    %c0_i32_1 = arith.constant 0 : i32
    return %c0_i32, %c0_i32_0 : i32, i32
  }
  func.func @transform_3(%arg0: i32) -> (i32, i32) {
    %c0_i32 = arith.constant 0 : i32
    %c0_i32_0 = arith.constant 0 : i32
    %c0_i32_1 = arith.constant 0 : i32
    return %c0_i32, %c0_i32_0 : i32, i32
  }
  func.func @transform_4(%arg0: i32) -> (i32, i32) {
    %c0_i32 = arith.constant 0 : i32
    %c0_i32_0 = arith.constant 0 : i32
    %c0_i32_1 = arith.constant 0 : i32
    return %c0_i32, %c0_i32_0 : i32, i32
  }
  func.func @transform_5(%arg0: i32) -> (i32, i32) {
    %c0_i32 = arith.constant 0 : i32
    %c0_i32_0 = arith.constant 0 : i32
    return %arg0, %c0_i32 : i32, i32
  }
}

</mosaic_0001>

<llo_original>
// kernel: discriminator_forward.1
$region0: #{discriminator_forward.1}
  #allocation0 [shape = 'u32[]', space=smem, size = 0x4, offset = 0x4, fixed_abs, tag = 'smem constant byte address 0x4 - core index']
  #allocation1 [shape = 'u32[144,128]{1,0:T(1,128)}', space=vmem, size = 0x12000, scoped, tag = 'internal scratch']
  %s0 = inlined_call_operand.hbm [shape: f32[64,256], index: 0, kind: input, shape index: {}]
  %s1 = inlined_call_operand.hbm [shape: bf16[256,256], index: 1, kind: input, shape index: {}]
  %s2 = inlined_call_operand.vmem [shape: f32[1,256], index: 2, kind: input, shape index: {}]
  %s3 = inlined_call_operand.hbm [shape: bf16[256,128], index: 3, kind: input, shape index: {}]
  %s4 = inlined_call_operand.vmem [shape: f32[1,128], index: 4, kind: input, shape index: {}]
  %s5 = inlined_call_operand.vmem [shape: f32[64,128], index: 5, kind: output, shape index: {}]
  %s6 = sld [smem:[#allocation0]]
  $region42: #{discriminator_forward.1} parent=0
    _
  %s8 = ssub.s32 1, %s6
  %s9 = scalar_select 0, %s8, %s6
  $region1: #{discriminator_forward.1} parent=0
    #allocation2 [shape = 'u8[65536]{0}', space=vmem, size = 0x10000, scoped, tag = 'input window, operand 0, single buffered']
    #allocation3 [shape = 's32[1]{0}', space=sflag, size = 0x4, scoped, tag = 'scoped memory for discriminator_forward.1']
    #allocation4 [shape = 'u8[131072]{0}', space=vmem, size = 0x20000, scoped, tag = 'input window, operand 1, single buffered']
    #allocation5 [shape = 's32[1]{0}', space=sflag, size = 0x4, scoped, tag = 'scoped memory for discriminator_forward.1']
    #allocation6 [shape = 'u8[65536]{0}', space=vmem, size = 0x10000, scoped, tag = 'input window, operand 3, single buffered']
    %10 = vsyncpa [#allocation3], 0
    %11 = vsyncpa [#allocation5], 0
    // Predicated region
    $region2: #{discriminator_forward.1} parent=1 // pred_check
      _
    $region3: #{discriminator_forward.1} parent=1 // pred_check_branch
      %13 = sbr.rel (0) target = $region5
    $region4: #{discriminator_forward.1} parent=1 // pred_region
      %s15 = ssub.s32 2048, 2048
      %16 = vsyncadd [#allocation3], %s15
      %s17 = sshll.u32 [#allocation2], 4
      %s18 = int_to_ptr.vmem [resolvable:$true] %s17
      %23 = dma.hbm_to_vmem [thread:$0]  %s0, 2048, %s18, [#allocation3], 256, 256, 16
    $region5: #{discriminator_forward.1} parent=1 // pred_fallthru
      _
    // Predicated region
    $region6: #{discriminator_forward.1} parent=1 // pred_check
      _
    $region7: #{discriminator_forward.1} parent=1 // pred_check_branch
      %25 = sbr.rel (0) target = $region9
    $region8: #{discriminator_forward.1} parent=1 // pred_region
      %s27 = ssub.s32 4096, 4096
      %28 = vsyncadd [#allocation5], %s27
      %s29 = sshll.u32 [#allocation4], 4
      %s30 = int_to_ptr.vmem [resolvable:$true] %s29
      %35 = dma.hbm_to_vmem [thread:$0]  %s1, 4096, %s30, [#allocation5], 128, 128, 8
    $region9: #{discriminator_forward.1} parent=1 // pred_fallthru
      _
    // Predicated region
    $region10: #{discriminator_forward.1} parent=1 // pred_check
      _
    $region11: #{discriminator_forward.1} parent=1 // pred_check_branch
      %37 = sbr.rel (0) target = $region13
    $region12: #{discriminator_forward.1} parent=1 // pred_region
      _
    $region13: #{discriminator_forward.1} parent=1 // pred_fallthru
      _
    // Predicated region
    $region14: #{discriminator_forward.1} parent=1 // pred_check
      _
    $region15: #{discriminator_forward.1} parent=1 // pred_check_branch
      %39 = sbr.rel (0) target = $region17
    $region16: #{discriminator_forward.1} parent=1 // pred_region
      %s41 = ssub.s32 2048, 2048
      %42 = vsyncadd [#allocation5], %s41
      %s43 = sshll.u32 [#allocation6], 4
      %s44 = int_to_ptr.vmem [resolvable:$true] %s43
      %49 = dma.hbm_to_vmem [thread:$0]  %s3, 2048, %s44, [#allocation5], 64, 64, 4
    $region17: #{discriminator_forward.1} parent=1 // pred_fallthru
      _
    // Predicated region
    $region18: #{discriminator_forward.1} parent=1 // pred_check
      _
    $region19: #{discriminator_forward.1} parent=1 // pred_check_branch
      %51 = sbr.rel (0) target = $region21
    $region20: #{discriminator_forward.1} parent=1 // pred_region
      _
    $region21: #{discriminator_forward.1} parent=1 // pred_fallthru
      _
    // Predicated region
    $region22: #{discriminator_forward.1} parent=1 // pred_check
      _
    $region23: #{discriminator_forward.1} parent=1 // pred_check_branch
      %53 = sbr.rel (0) target = $region25
    $region24: #{discriminator_forward.1} parent=1 // pred_region
      %54 = dma.done [#allocation3], 2048
    $region25: #{discriminator_forward.1} parent=1 // pred_fallthru
      _
    // Predicated region
    $region26: #{discriminator_forward.1} parent=1 // pred_check
      _
    $region27: #{discriminator_forward.1} parent=1 // pred_check_branch
      %56 = sbr.rel (0) target = $region29
    $region28: #{discriminator_forward.1} parent=1 // pred_region
      %57 = dma.done [#allocation5], 4096
    $region29: #{discriminator_forward.1} parent=1 // pred_fallthru
      _
    // Predicated region
    $region30: #{discriminator_forward.1} parent=1 // pred_check
      _
    $region31: #{discriminator_forward.1} parent=1 // pred_check_branch
      %59 = sbr.rel (0) target = $region33
    $region32: #{discriminator_forward.1} parent=1 // pred_region
      %60 = dma.done [#allocation5], 2048
    $region33: #{discriminator_forward.1} parent=1 // pred_fallthru
      _
    %v62 = vld [vmem:[#allocation2] sm:$0xff]
    %v63 = vld [vmem:[#allocation2 + $0x8] sm:$0xff]
    %v64 = vld [vmem:[#allocation2 + $0x10] sm:$0xff]
    %v65 = vld [vmem:[#allocation2 + $0x18] sm:$0xff]
    %v66 = vld [vmem:[#allocation2 + $0x20] sm:$0xff]
    %v67 = vld [vmem:[#allocation2 + $0x28] sm:$0xff]
    %v68 = vld [vmem:[#allocation2 + $0x30] sm:$0xff]
    %v69 = vld [vmem:[#allocation2 + $0x38] sm:$0xff]
    %v70 = vld [vmem:[#allocation2 + $0x40] sm:$0xff]
    %v71 = vld [vmem:[#allocation2 + $0x48] sm:$0xff]
    %v72 = vld [vmem:[#allocation2 + $0x50] sm:$0xff]
    %v73 = vld [vmem:[#allocation2 + $0x58] sm:$0xff]
    %v74 = vld [vmem:[#allocation2 + $0x60] sm:$0xff]
    %v75 = vld [vmem:[#allocation2 + $0x68] sm:$0xff]
    %v76 = vld [vmem:[#allocation2 + $0x70] sm:$0xff]
    %v77 = vld [vmem:[#allocation2 + $0x78] sm:$0xff]
    %v78 = vpack.c.bf16 %v64, %v62
    %v79 = vpack.c.bf16 %v65, %v63
    %v80 = vpack.c.bf16 %v68, %v66
    %v81 = vpack.c.bf16 %v69, %v67
    %v82 = vpack.c.bf16 %v72, %v70
    %v83 = vpack.c.bf16 %v73, %v71
    %v84 = vpack.c.bf16 %v76, %v74
    %v85 = vpack.c.bf16 %v77, %v75
    %v86 = vld [vmem:[#allocation4] sm:$0xff]
    %v87 = vld [vmem:[#allocation4 + $0x8] sm:$0xff]
    %v88 = vld [vmem:[#allocation4 + $0x10] sm:$0xff]
    %v89 = vld [vmem:[#allocation4 + $0x18] sm:$0xff]
    %v90 = vld [vmem:[#allocation4 + $0x20] sm:$0xff]
    %v91 = vld [vmem:[#allocation4 + $0x28] sm:$0xff]
    %v92 = vld [vmem:[#allocation4 + $0x30] sm:$0xff]
    %v93 = vld [vmem:[#allocation4 + $0x38] sm:$0xff]
    %v94 = vld [vmem:[#allocation4 + $0x40] sm:$0xff]
    %v95 = vld [vmem:[#allocation4 + $0x48] sm:$0xff]
    %v96 = vld [vmem:[#allocation4 + $0x50] sm:$0xff]
    %v97 = vld [vmem:[#allocation4 + $0x58] sm:$0xff]
    %v98 = vld [vmem:[#allocation4 + $0x60] sm:$0xff]
    %v99 = vld [vmem:[#allocation4 + $0x68] sm:$0xff]
    %v100 = vld [vmem:[#allocation4 + $0x70] sm:$0xff]
    %v101 = vld [vmem:[#allocation4 + $0x78] sm:$0xff]
    %v102 = vld [vmem:[#allocation4 + $0x80] sm:$0xff]
    %v103 = vld [vmem:[#allocation4 + $0x88] sm:$0xff]
    %v104 = vld [vmem:[#allocation4 + $0x90] sm:$0xff]
    %v105 = vld [vmem:[#allocation4 + $0x98] sm:$0xff]
    %v106 = vld [vmem:[#allocation4 + $0xa0] sm:$0xff]
    %v107 = vld [vmem:[#allocation4 + $0xa8] sm:$0xff]
    %v108 = vld [vmem:[#allocation4 + $0xb0] sm:$0xff]
    %v109 = vld [vmem:[#allocation4 + $0xb8] sm:$0xff]
    %v110 = vld [vmem:[#allocation4 + $0xc0] sm:$0xff]
    %v111 = vld [vmem:[#allocation4 + $0xc8] sm:$0xff]
    %v112 = vld [vmem:[#allocation4 + $0xd0] sm:$0xff]
    %v113 = vld [vmem:[#allocation4 + $0xd8] sm:$0xff]
    %v114 = vld [vmem:[#allocation4 + $0xe0] sm:$0xff]
    %v115 = vld [vmem:[#allocation4 + $0xe8] sm:$0xff]
    %v116 = vld [vmem:[#allocation4 + $0xf0] sm:$0xff]
    %v117 = vld [vmem:[#allocation4 + $0xf8] sm:$0xff]
    %v118 = vld [vmem:[%s2] sm:$0x3]
    %v120 = vlaneseq
    %v121 = vshrl.u32 %v120, 7
    %v122 = vsub.s32 0, %v121
    %v123 = vrot.slane %v118, %v122
    %v124 = vlaneseq
    %v125 = vshrl.u32 %v124, 7
    %v126 = vsub.s32 1, %v125
    %v127 = vrot.slane %v118, %v126
    %v162 = vunpack.c.l.b16 %v86
    %v163 = vunpack.c.h.b16 %v86
    %v164 = vunpack.c.l.b16 %v87
    %v165 = vunpack.c.h.b16 %v87
    %v166 = vunpack.c.l.b16 %v88
    %v167 = vunpack.c.h.b16 %v88
    %v168 = vunpack.c.l.b16 %v89
    %v169 = vunpack.c.h.b16 %v89
    %v170 = vunpack.c.l.b16 %v90
    %v171 = vunpack.c.h.b16 %v90
    %v172 = vunpack.c.l.b16 %v91
    %v173 = vunpack.c.h.b16 %v91
    %v174 = vunpack.c.l.b16 %v92
    %v175 = vunpack.c.h.b16 %v92
    %v176 = vunpack.c.l.b16 %v93
    %v177 = vunpack.c.h.b16 %v93
    %v178 = vunpack.c.l.b16 %v94
    %v179 = vunpack.c.h.b16 %v94
    %v180 = vunpack.c.l.b16 %v95
    %v181 = vunpack.c.h.b16 %v95
    %v182 = vunpack.c.l.b16 %v96
    %v183 = vunpack.c.h.b16 %v96
    %v184 = vunpack.c.l.b16 %v97
    %v185 = vunpack.c.h.b16 %v97
    %v186 = vunpack.c.l.b16 %v98
    %v187 = vunpack.c.h.b16 %v98
    %v188 = vunpack.c.l.b16 %v99
    %v189 = vunpack.c.h.b16 %v99
    %v190 = vunpack.c.l.b16 %v100
    %v191 = vunpack.c.h.b16 %v100
    %v192 = vunpack.c.l.b16 %v101
    %v193 = vunpack.c.h.b16 %v101
    %v194 = vunpack.c.l.b16 %v102
    %v195 = vunpack.c.h.b16 %v102
    %v196 = vunpack.c.l.b16 %v103
    %v197 = vunpack.c.h.b16 %v103
    %v198 = vunpack.c.l.b16 %v104
    %v199 = vunpack.c.h.b16 %v104
    %v200 = vunpack.c.l.b16 %v105
    %v201 = vunpack.c.h.b16 %v105
    %v202 = vunpack.c.l.b16 %v106
    %v203 = vunpack.c.h.b16 %v106
    %v204 = vunpack.c.l.b16 %v107
    %v205 = vunpack.c.h.b16 %v107
    %v206 = vunpack.c.l.b16 %v108
    %v207 = vunpack.c.h.b16 %v108
    %v208 = vunpack.c.l.b16 %v109
    %v209 = vunpack.c.h.b16 %v109
    %v210 = vunpack.c.l.b16 %v110
    %v211 = vunpack.c.h.b16 %v110
    %v212 = vunpack.c.l.b16 %v111
    %v213 = vunpack.c.h.b16 %v111
    %v214 = vunpack.c.l.b16 %v112
    %v215 = vunpack.c.h.b16 %v112
    %v216 = vunpack.c.l.b16 %v113
    %v217 = vunpack.c.h.b16 %v113
    %v218 = vunpack.c.l.b16 %v114
    %v219 = vunpack.c.h.b16 %v114
    %v220 = vunpack.c.l.b16 %v115
    %v221 = vunpack.c.h.b16 %v115
    %v222 = vunpack.c.l.b16 %v116
    %v223 = vunpack.c.h.b16 %v116
    %v224 = vunpack.c.l.b16 %v117
    %v225 = vunpack.c.h.b16 %v117
    %v226 = vpack.c.b16 %v164, %v162
    %v227 = vpack.c.b16 %v165, %v163
    %v228 = vpack.c.b16 %v168, %v166
    %v229 = vpack.c.b16 %v169, %v167
    %v230 = vpack.c.b16 %v172, %v170
    %v231 = vpack.c.b16 %v173, %v171
    %v232 = vpack.c.b16 %v176, %v174
    %v233 = vpack.c.b16 %v177, %v175
    %v234 = vpack.c.b16 %v180, %v178
    %v235 = vpack.c.b16 %v181, %v179
    %v236 = vpack.c.b16 %v184, %v182
    %v237 = vpack.c.b16 %v185, %v183
    %v238 = vpack.c.b16 %v188, %v186
    %v239 = vpack.c.b16 %v189, %v187
    %v240 = vpack.c.b16 %v192, %v190
    %v241 = vpack.c.b16 %v193, %v191
    %v242 = vpack.c.b16 %v196, %v194
    %v243 = vpack.c.b16 %v197, %v195
    %v244 = vpack.c.b16 %v200, %v198
    %v245 = vpack.c.b16 %v201, %v199
    %v246 = vpack.c.b16 %v204, %v202
    %v247 = vpack.c.b16 %v205, %v203
    %v248 = vpack.c.b16 %v208, %v206
    %v249 = vpack.c.b16 %v209, %v207
    %v250 = vpack.c.b16 %v212, %v210
    %v251 = vpack.c.b16 %v213, %v211
    %v252 = vpack.c.b16 %v216, %v214
    %v253 = vpack.c.b16 %v217, %v215
    %v254 = vpack.c.b16 %v220, %v218
    %v255 = vpack.c.b16 %v221, %v219
    %v256 = vpack.c.b16 %v224, %v222
    %v257 = vpack.c.b16 %v225, %v223
    %290 = vmatprep.subr.bf16.mxu0 %v227
    %291 = vmatpush1.bf16.msra.mxu0 %v226
    %292 = vmatprep.subr.bf16.mxu0 %v229
    %293 = vmatpush1.bf16.msra.mxu0 %v228
    %294 = vmatprep.subr.bf16.mxu0 %v231
    %295 = vmatpush1.bf16.msra.mxu0 %v230
    %296 = vmatprep.subr.bf16.mxu0 %v233
    %297 = vmatpush1.bf16.msra.mxu0 %v232
    %298 = vmatprep.subr.bf16.mxu0 %v235
    %299 = vmatpush1.bf16.msra.mxu0 %v234
    %300 = vmatprep.subr.bf16.mxu0 %v237
    %301 = vmatpush1.bf16.msra.mxu0 %v236
    %302 = vmatprep.subr.bf16.mxu0 %v239
    %303 = vmatpush1.bf16.msra.mxu0 %v238
    %304 = vmatprep.subr.bf16.mxu0 %v241
    %305 = vmatpush1.bf16.msra.mxu0 %v240
    %306 = vmatprep.subr.bf16.mxu0 %v243
    %307 = vmatpush1.bf16.msra.mxu0 %v242
    %308 = vmatprep.subr.bf16.mxu0 %v245
    %309 = vmatpush1.bf16.msra.mxu0 %v244
    %310 = vmatprep.subr.bf16.mxu0 %v247
    %311 = vmatpush1.bf16.msra.mxu0 %v246
    %312 = vmatprep.subr.bf16.mxu0 %v249
    %313 = vmatpush1.bf16.msra.mxu0 %v248
    %314 = vmatprep.subr.bf16.mxu0 %v251
    %315 = vmatpush1.bf16.msra.mxu0 %v250
    %316 = vmatprep.subr.bf16.mxu0 %v253
    %317 = vmatpush1.bf16.msra.mxu0 %v252
    %318 = vmatprep.subr.bf16.mxu0 %v255
    %319 = vmatpush1.bf16.msra.mxu0 %v254
    %320 = vmatprep.subr.bf16.mxu0 %v257
    %321 = vmatpush1.bf16.msra.mxu0 %v256
    %322 = vmatprep.mubr.bf16.mxu0 %v79
    %323 = vmatmul.mubr.bf16.gmra.mrb[0].mxu0 %v78
    %v324 = vpop.f32.mrb[0].mxu0
    %v325 = vadd.f32 %v123, %v324
    %v326 = vpop.f32.mrb[0].mxu0
    %v327 = vadd.f32 %v127, %v326
    %v328 = vpop.f32.mrb[0].mxu0
    %v329 = vadd.f32 %v123, %v328
    %v330 = vpop.f32.mrb[0].mxu0
    %v331 = vadd.f32 %v127, %v330
    %332 = vmatprep.mubr.bf16.mxu0 %v81
    %333 = vmatmul.mubr.bf16.gmra.mrb[0].mxu0 %v80
    %v334 = vpop.f32.mrb[0].mxu0
    %v335 = vadd.f32 %v123, %v334
    %v336 = vpop.f32.mrb[0].mxu0
    %v337 = vadd.f32 %v127, %v336
    %v338 = vpop.f32.mrb[0].mxu0
    %v339 = vadd.f32 %v123, %v338
    %v340 = vpop.f32.mrb[0].mxu0
    %v341 = vadd.f32 %v127, %v340
    %342 = vmatprep.mubr.bf16.mxu0 %v83
    %343 = vmatmul.mubr.bf16.gmra.mrb[0].mxu0 %v82
    %v344 = vpop.f32.mrb[0].mxu0
    %v345 = vadd.f32 %v123, %v344
    %v346 = vpop.f32.mrb[0].mxu0
    %v347 = vadd.f32 %v127, %v346
    %v348 = vpop.f32.mrb[0].mxu0
    %v349 = vadd.f32 %v123, %v348
    %v350 = vpop.f32.mrb[0].mxu0
    %v351 = vadd.f32 %v127, %v350
    %352 = vmatprep.mubr.bf16.mxu0 %v85
    %353 = vmatmul.mubr.bf16.gmra.mrb[0].mxu0 %v84
    %v354 = vpop.f32.mrb[0].mxu0
    %v355 = vadd.f32 %v123, %v354
    %v356 = vpop.f32.mrb[0].mxu0
    %v357 = vadd.f32 %v127, %v356
    %v358 = vpop.f32.mrb[0].mxu0
    %v359 = vadd.f32 %v123, %v358
    %v360 = vpop.f32.mrb[0].mxu0
    %v361 = vadd.f32 %v127, %v360
    %362 = vdwg.mxu0
    %v363 = vpack.c.bf16 %v329, %v325
    %v364 = vpack.c.bf16 %v331, %v327
    %v365 = vpack.c.bf16 %v339, %v335
    %v366 = vpack.c.bf16 %v341, %v337
    %v367 = vpack.c.bf16 %v349, %v345
    %v368 = vpack.c.bf16 %v351, %v347
    %v369 = vpack.c.bf16 %v359, %v355
    %v370 = vpack.c.bf16 %v361, %v357
    %v371 = vtanh.bf16.pop %v363
    %v372 = vtanh.bf16.pop %v364
    %v373 = vtanh.bf16.pop %v365
    %v374 = vtanh.bf16.pop %v366
    %v375 = vtanh.bf16.pop %v367
    %v376 = vtanh.bf16.pop %v368
    %v377 = vtanh.bf16.pop %v369
    %v378 = vtanh.bf16.pop %v370
    %v379 = vld [vmem:[#allocation6] sm:$0xf]
    %v380 = vld [vmem:[#allocation6 + $0x4] sm:$0xf]
    %v381 = vld [vmem:[#allocation6 + $0x8] sm:$0xf]
    %v382 = vld [vmem:[#allocation6 + $0xc] sm:$0xf]
    %v383 = vld [vmem:[#allocation6 + $0x10] sm:$0xf]
    %v384 = vld [vmem:[#allocation6 + $0x14] sm:$0xf]
    %v385 = vld [vmem:[#allocation6 + $0x18] sm:$0xf]
    %v386 = vld [vmem:[#allocation6 + $0x1c] sm:$0xf]
    %v387 = vld [vmem:[#allocation6 + $0x20] sm:$0xf]
    %v388 = vld [vmem:[#allocation6 + $0x24] sm:$0xf]
    %v389 = vld [vmem:[#allocation6 + $0x28] sm:$0xf]
    %v390 = vld [vmem:[#allocation6 + $0x2c] sm:$0xf]
    %v391 = vld [vmem:[#allocation6 + $0x30] sm:$0xf]
    %v392 = vld [vmem:[#allocation6 + $0x34] sm:$0xf]
    %v393 = vld [vmem:[#allocation6 + $0x38] sm:$0xf]
    %v394 = vld [vmem:[#allocation6 + $0x3c] sm:$0xf]
    %v395 = vld [vmem:[#allocation6 + $0x40] sm:$0xf]
    %v396 = vld [vmem:[#allocation6 + $0x44] sm:$0xf]
    %v397 = vld [vmem:[#allocation6 + $0x48] sm:$0xf]
    %v398 = vld [vmem:[#allocation6 + $0x4c] sm:$0xf]
    %v399 = vld [vmem:[#allocation6 + $0x50] sm:$0xf]
    %v400 = vld [vmem:[#allocation6 + $0x54] sm:$0xf]
    %v401 = vld [vmem:[#allocation6 + $0x58] sm:$0xf]
    %v402 = vld [vmem:[#allocation6 + $0x5c] sm:$0xf]
    %v403 = vld [vmem:[#allocation6 + $0x60] sm:$0xf]
    %v404 = vld [vmem:[#allocation6 + $0x64] sm:$0xf]
    %v405 = vld [vmem:[#allocation6 + $0x68] sm:$0xf]
    %v406 = vld [vmem:[#allocation6 + $0x6c] sm:$0xf]
    %v407 = vld [vmem:[#allocation6 + $0x70] sm:$0xf]
    %v408 = vld [vmem:[#allocation6 + $0x74] sm:$0xf]
    %v409 = vld [vmem:[#allocation6 + $0x78] sm:$0xf]
    %v410 = vld [vmem:[#allocation6 + $0x7c] sm:$0xf]
    %v411 = vld [vmem:[%s4] sm:$0x1]
    %v413 = vlaneseq
    %v414 = vshrl.u32 %v413, 7
    %v415 = vsub.s32 0, %v414
    %v416 = vrot.slane %v411, %v415
    %v450 = vunpack.c.l.b16 %v379
    %v451 = vunpack.c.l.b16 %v380
    %v452 = vunpack.c.l.b16 %v381
    %v453 = vunpack.c.l.b16 %v382
    %v454 = vunpack.c.l.b16 %v383
    %v455 = vunpack.c.l.b16 %v384
    %v456 = vunpack.c.l.b16 %v385
    %v457 = vunpack.c.l.b16 %v386
    %v458 = vunpack.c.l.b16 %v387
    %v459 = vunpack.c.l.b16 %v388
    %v460 = vunpack.c.l.b16 %v389
    %v461 = vunpack.c.l.b16 %v390
    %v462 = vunpack.c.l.b16 %v391
    %v463 = vunpack.c.l.b16 %v392
    %v464 = vunpack.c.l.b16 %v393
    %v465 = vunpack.c.l.b16 %v394
    %v466 = vunpack.c.l.b16 %v395
    %v467 = vunpack.c.l.b16 %v396
    %v468 = vunpack.c.l.b16 %v397
    %v469 = vunpack.c.l.b16 %v398
    %v470 = vunpack.c.l.b16 %v399
    %v471 = vunpack.c.l.b16 %v400
    %v472 = vunpack.c.l.b16 %v401
    %v473 = vunpack.c.l.b16 %v402
    %v474 = vunpack.c.l.b16 %v403
    %v475 = vunpack.c.l.b16 %v404
    %v476 = vunpack.c.l.b16 %v405
    %v477 = vunpack.c.l.b16 %v406
    %v478 = vunpack.c.l.b16 %v407
    %v479 = vunpack.c.l.b16 %v408
    %v480 = vunpack.c.l.b16 %v409
    %v481 = vunpack.c.l.b16 %v410
    %v482 = vpack.c.b16 %v451, %v450
    %v483 = vpack.c.b16 %v453, %v452
    %v484 = vpack.c.b16 %v455, %v454
    %v485 = vpack.c.b16 %v457, %v456
    %v486 = vpack.c.b16 %v459, %v458
    %v487 = vpack.c.b16 %v461, %v460
    %v488 = vpack.c.b16 %v463, %v462
    %v489 = vpack.c.b16 %v465, %v464
    %v490 = vpack.c.b16 %v467, %v466
    %v491 = vpack.c.b16 %v469, %v468
    %v492 = vpack.c.b16 %v471, %v470
    %v493 = vpack.c.b16 %v473, %v472
    %v494 = vpack.c.b16 %v475, %v474
    %v495 = vpack.c.b16 %v477, %v476
    %v496 = vpack.c.b16 %v479, %v478
    %v497 = vpack.c.b16 %v481, %v480
    %514 = vmatprep.subr.bf16.mxu0 0
    %515 = vmatpush1.bf16.msra.mxu0 %v482
    %516 = vmatprep.subr.bf16.mxu0 0
    %517 = vmatpush1.bf16.msra.mxu0 %v483
    %518 = vmatprep.subr.bf16.mxu0 0
    %519 = vmatpush1.bf16.msra.mxu0 %v484
    %520 = vmatprep.subr.bf16.mxu0 0
    %521 = vmatpush1.bf16.msra.mxu0 %v485
    %522 = vmatprep.subr.bf16.mxu0 0
    %523 = vmatpush1.bf16.msra.mxu0 %v486
    %524 = vmatprep.subr.bf16.mxu0 0
    %525 = vmatpush1.bf16.msra.mxu0 %v487
    %526 = vmatprep.subr.bf16.mxu0 0
    %527 = vmatpush1.bf16.msra.mxu0 %v488
    %528 = vmatprep.subr.bf16.mxu0 0
    %529 = vmatpush1.bf16.msra.mxu0 %v489
    %530 = vmatprep.subr.bf16.mxu0 0
    %531 = vmatpush1.bf16.msra.mxu0 %v490
    %532 = vmatprep.subr.bf16.mxu0 0
    %533 = vmatpush1.bf16.msra.mxu0 %v491
    %534 = vmatprep.subr.bf16.mxu0 0
    %535 = vmatpush1.bf16.msra.mxu0 %v492
    %536 = vmatprep.subr.bf16.mxu0 0
    %537 = vmatpush1.bf16.msra.mxu0 %v493
    %538 = vmatprep.subr.bf16.mxu0 0
    %539 = vmatpush1.bf16.msra.mxu0 %v494
    %540 = vmatprep.subr.bf16.mxu0 0
    %541 = vmatpush1.bf16.msra.mxu0 %v495
    %542 = vmatprep.subr.bf16.mxu0 0
    %543 = vmatpush1.bf16.msra.mxu0 %v496
    %544 = vmatprep.subr.bf16.mxu0 0
    %545 = vmatpush1.bf16.msra.mxu0 %v497
    %546 = vmatprep.mubr.bf16.mxu0 %v372
    %547 = vmatmul.mubr.bf16.gmra.mrb[0].mxu0 %v371
    %v548 = vpop.f32.mrb[0].mxu0
    %v549 = vadd.f32 %v416, %v548
    %v550 = vpop.f32.mrb[0].mxu0
    %v551 = vpop.f32.mrb[0].mxu0
    %v552 = vadd.f32 %v416, %v551
    %v553 = vpop.f32.mrb[0].mxu0
    %554 = vmatprep.mubr.bf16.mxu0 %v374
    %555 = vmatmul.mubr.bf16.gmra.mrb[0].mxu0 %v373
    %v556 = vpop.f32.mrb[0].mxu0
    %v557 = vadd.f32 %v416, %v556
    %v558 = vpop.f32.mrb[0].mxu0
    %v559 = vpop.f32.mrb[0].mxu0
    %v560 = vadd.f32 %v416, %v559
    %v561 = vpop.f32.mrb[0].mxu0
    %562 = vmatprep.mubr.bf16.mxu0 %v376
    %563 = vmatmul.mubr.bf16.gmra.mrb[0].mxu0 %v375
    %v564 = vpop.f32.mrb[0].mxu0
    %v565 = vadd.f32 %v416, %v564
    %v566 = vpop.f32.mrb[0].mxu0
    %v567 = vpop.f32.mrb[0].mxu0
    %v568 = vadd.f32 %v416, %v567
    %v569 = vpop.f32.mrb[0].mxu0
    %570 = vmatprep.mubr.bf16.mxu0 %v378
    %571 = vmatmul.mubr.bf16.gmra.mrb[0].mxu0 %v377
    %v572 = vpop.f32.mrb[0].mxu0
    %v573 = vadd.f32 %v416, %v572
    %v574 = vpop.f32.mrb[0].mxu0
    %v575 = vpop.f32.mrb[0].mxu0
    %v576 = vadd.f32 %v416, %v575
    %v577 = vpop.f32.mrb[0].mxu0
    %578 = vdwg.mxu0
    %579 = vst [vmem:[%s5] sm:$0xff] %v549
    %580 = vst [vmem:[%s5 + $0x8] sm:$0xff] %v552
    %581 = vst [vmem:[%s5 + $0x10] sm:$0xff] %v557
    %582 = vst [vmem:[%s5 + $0x18] sm:$0xff] %v560
    %583 = vst [vmem:[%s5 + $0x20] sm:$0xff] %v565
    %584 = vst [vmem:[%s5 + $0x28] sm:$0xff] %v568
    %585 = vst [vmem:[%s5 + $0x30] sm:$0xff] %v573
    %586 = vst [vmem:[%s5 + $0x38] sm:$0xff] %v576
    // Predicated region
    $region34: #{discriminator_forward.1} parent=1 // pred_check
      _
    $region35: #{discriminator_forward.1} parent=1 // pred_check_branch
      %588 = sbr.rel (0) target = $region37
    $region36: #{discriminator_forward.1} parent=1 // pred_region
      _
    $region37: #{discriminator_forward.1} parent=1 // pred_fallthru
      _
    // Predicated region
    $region38: #{discriminator_forward.1} parent=1 // pred_check
      _
    $region39: #{discriminator_forward.1} parent=1 // pred_check_branch
      %590 = sbr.rel (0) target = $region41
    $region40: #{discriminator_forward.1} parent=1 // pred_region
      _
    $region41: #{discriminator_forward.1} parent=1 // pred_fallthru
      _
    %591 = vsyncpa [#allocation3], 1
    %592 = vsyncpa [#allocation5], 1

</llo_original>
